<compile_context>
chip_gen: v6e
topology: v6e:2x2x1
jax: 0.10.0
libtpu: 0.0.40
codegen_flags: <defaults>
</compile_context>

<pallas_src>
import jax
import jax.numpy as jnp
from jax.experimental import pallas as pl
from jax.experimental.pallas import tpu as pltpu


def _round_up(n, m):
    return ((n + m - 1) // m) * m


def _cdiv(a, b):
    return (a + b - 1) // b


# ---------------------------------------------------------------------------
# Kernels
# ---------------------------------------------------------------------------
def _heads_kernel_single_k(x_ref, w_ref, b_ref, o_ref):
    """Single K step: o = x @ W + b. No scratch, no zero-init, no pl.when."""
    acc = jnp.dot(x_ref[...].astype(jnp.bfloat16), w_ref[...],
                  preferred_element_type=jnp.float32)
    o_ref[...] = (acc + b_ref[...]).astype(o_ref.dtype)


def _heads_kernel_multi_k(x_ref, w_ref, b_ref, o_ref, acc_ref):
    """K-tiled variant with an f32 VMEM accumulator resident over K.

    NOTE: correctness relies on K being the LAST (innermost, "arbitrary") grid
    axis so the accumulator is fully reduced before the output tile changes.
    Reordering the grid would silently corrupt results.
    """
    k = pl.program_id(1)

    @pl.when(k == 0)
    def _init():
        acc_ref[...] = jnp.zeros_like(acc_ref)

    acc_ref[...] += jnp.dot(x_ref[...].astype(jnp.bfloat16), w_ref[...],
                            preferred_element_type=jnp.float32)

    @pl.when(k == pl.num_programs(1) - 1)
    def _finalize():
        o_ref[...] = (acc_ref[...] + b_ref[...]).astype(o_ref.dtype)


# ---------------------------------------------------------------------------
# Planning / setup
# ---------------------------------------------------------------------------
def _tpu_vmem_capacity():
    try:
        return pltpu.get_tpu_info().vmem_capacity_bytes
    except Exception:
        return 64 * 1024 * 1024  # assume the smallest (v7x) part


def plan_fused_heads(feature_dim, c_total, x_dtype, max_tile_k=None):
    """Static tiling plan for the fused Linear heads (shared input, concat C)."""
    x_itemsize = jnp.dtype(x_dtype).itemsize
    w_itemsize = 2  # weights stored bf16
    sub = 16 if x_itemsize == 2 else 8  # sublane multiple for x/out blocks

    cap = _tpu_vmem_capacity()
    budget = max(cap // 4, 8 * 1024 * 1024)
    vmem_limit = int(min(cap // 2, 64 * 1024 * 1024))

    def working_set(tb, tk, multi_k):
        x_b = tb * tk * x_itemsize
        w_b = tk * c_total * w_itemsize
        b_b = c_total * 4
        o_b = tb * c_total * x_itemsize
        acc = tb * c_total * 4 if multi_k else 0
        return 2 * (x_b + w_b + b_b + o_b) + acc  # double-buffered pipeline

    force_multi_k = (max_tile_k is not None) and (max_tile_k < feature_dim)

    if not force_multi_k:
        # Prefer a single K step (full F, no F padding, no accumulator pass)
        # whenever the double-buffered working set fits the VMEM budget.
        tile_b_cap = 512
        while tile_b_cap > 64 and working_set(tile_b_cap, feature_dim, False) > budget:
            tile_b_cap //= 2
        if working_set(tile_b_cap, feature_dim, False) <= budget:
            return dict(sub=sub, tile_b_cap=tile_b_cap, tile_k=feature_dim,
                        f_pad=feature_dim, c_total=c_total,
                        vmem_limit=vmem_limit)

    tile_k = max_tile_k if force_multi_k else 512
    assert tile_k % 128 == 0, "K tile must be a multiple of 128 lanes"
    f_pad = _round_up(feature_dim, tile_k)
    tile_b_cap = 512
    while tile_b_cap > sub and working_set(tile_b_cap, tile_k, True) > budget:
        tile_b_cap //= 2
    return dict(sub=sub, tile_b_cap=tile_b_cap, tile_k=tile_k, f_pad=f_pad,
                c_total=c_total, vmem_limit=vmem_limit)


def prepare_fused_heads(heads, plan):
    """One-time parameter prep for heads sharing the same input features.

    heads: list of (weight (C_i, F), bias (C_i,)).
    Transpose each weight to K-major (F, C_i), concat along C, zero-pad K to
    f_pad, cast to bf16. Bias is concatenated and kept f32. Done ONCE at setup,
    never per forward.
    """
    f_pad = plan["f_pad"]
    w_cols, b_cols, dims = [], [], []
    for w, b in heads:
        c, _ = w.shape
        w_cols.append(jnp.transpose(w))               # (F, C_i), K-major
        b_cols.append(jnp.asarray(b, jnp.float32))
        dims.append(c)
    w_cat = jnp.concatenate(w_cols, axis=1)           # (F, c_total)
    f = w_cat.shape[0]
    if f_pad != f:
        w_cat = jnp.pad(w_cat, ((0, f_pad - f), (0, 0)))
    w_p = w_cat.astype(jnp.bfloat16)
    b_p = jnp.concatenate(b_cols).reshape(1, -1)      # (1, c_total), f32
    assert w_p.shape[1] == plan["c_total"] == b_p.shape[1]
    return w_p, b_p, tuple(dims)


# ---------------------------------------------------------------------------
# Forward
# ---------------------------------------------------------------------------
def dsn_heads_forward(x, w_p, b_p, head_dims, plan):
    """Fused y = x @ [W_cls | W_dom].T + [b_cls | b_dom]; one output per head."""
    B, F = x.shape
    sub = plan["sub"]
    tile_k = plan["tile_k"]
    f_pad = plan["f_pad"]
    c_total = plan["c_total"]

    # Batch tiling: give the 'parallel' batch axis >=2 grid points for larger
    # batches (v7x megacore) without padding tiny batches.
    if B >= 2 * sub:
        tile_b = min(plan["tile_b_cap"], _round_up(_cdiv(B, 2), sub))
    else:
        tile_b = _round_up(B, sub)
    tile_b = max(tile_b, sub)
    b_pad = _round_up(B, tile_b)

    if (b_pad, f_pad) != (B, F):
        x = jnp.pad(x, ((0, b_pad - B), (0, f_pad - F)))

    nk = f_pad // tile_k
    x_itemsize = jnp.dtype(x.dtype).itemsize
    cost = pl.CostEstimate(
        flops=2 * b_pad * f_pad * c_total,
        transcendentals=0,
        bytes_accessed=(b_pad * f_pad * x_itemsize        # x  (as DMA'd)
                        + f_pad * c_total * 2              # W  (bf16)
                        + c_total * 4                       # bias (f32)
                        + b_pad * c_total * x_itemsize))    # out

    compiler_params = pltpu.CompilerParams(
        dimension_semantics=("parallel",) if nk == 1 else ("parallel", "arbitrary"),
        vmem_limit_bytes=plan["vmem_limit"])

    if nk == 1:
        out = pl.pallas_call(
            _heads_kernel_single_k,
            out_shape=jax.ShapeDtypeStruct((b_pad, c_total), x.dtype),
            grid_spec=pltpu.PrefetchScalarGridSpec(
                num_scalar_prefetch=0,
                grid=(b_pad // tile_b,),
                in_specs=[
                    pl.BlockSpec((tile_b, f_pad), lambda i: (i, 0)),    # x
                    pl.BlockSpec((f_pad, c_total), lambda i: (0, 0)),   # W (K-major)
                    pl.BlockSpec((1, c_total), lambda i: (0, 0)),       # bias
                ],
                out_specs=pl.BlockSpec((tile_b, c_total), lambda i: (i, 0)),
            ),
            compiler_params=compiler_params,
            cost_estimate=cost,
        )(x, w_p, b_p)
    else:
        # K is the LAST grid axis (innermost) -> accumulator invariant holds.
        out = pl.pallas_call(
            _heads_kernel_multi_k,
            out_shape=jax.ShapeDtypeStruct((b_pad, c_total), x.dtype),
            grid_spec=pltpu.PrefetchScalarGridSpec(
                num_scalar_prefetch=0,
                grid=(b_pad // tile_b, nk),
                in_specs=[
                    pl.BlockSpec((tile_b, tile_k), lambda i, k: (i, k)),    # x
                    pl.BlockSpec((tile_k, c_total), lambda i, k: (k, 0)),   # W
                    pl.BlockSpec((1, c_total), lambda i, k: (0, 0)),        # bias
                ],
                out_specs=pl.BlockSpec((tile_b, c_total), lambda i, k: (i, 0)),
                scratch_shapes=[pltpu.VMEM((tile_b, c_total), jnp.float32)],
            ),
            compiler_params=compiler_params,
            cost_estimate=cost,
        )(x, w_p, b_p)

    out = out[:B]
    results, off = [], 0
    for c in head_dims:
        results.append(out[:, off:off + c])
        off += c
    return results


if __name__ == "__main__":
    # TODO(synk): DSN's conv encoders/decoders, FC encoders, gradient reversal
    # (identity in forward) and the reconstruction decoder are injected
    # sub-modules with no concrete definition in the spec; only the Linear
    # classifier heads (class + domain, fused since both consume the same
    # shared code) are implemented as a Pallas kernel here.
    key = jax.random.PRNGKey(0)

    configs = [
        # (batch, feature_dim, num_classes, num_domain_outputs, force_tile_k)
        (8, 100, 10, 4, None),           # shared-code heads, single-K fast path
        (12, 48 * 7 * 7, 5, 3, None),    # heads on the flattened 48*7*7 feature
        (64, 256, 16, 4, 128),           # exercises the multi-K accumulator path
    ]

    for idx, (B, F, n_cls, n_dom, force_tk) in enumerate(configs):
        key, kx, kw1, kb1, kw2, kb2 = jax.random.split(key, 6)
        x = jax.random.normal(kx, (B, F), dtype=jnp.float32)
        bound = 1.0 / (F ** 0.5)
        w_cls = 0.001 * jax.random.normal(kw1, (n_cls, F), dtype=jnp.float32)
        b_cls = jax.random.uniform(kb1, (n_cls,), jnp.float32, -bound, bound)
        w_dom = 0.001 * jax.random.normal(kw2, (n_dom, F), dtype=jnp.float32)
        b_dom = jax.random.uniform(kb2, (n_dom,), jnp.float32, -bound, bound)

        plan = plan_fused_heads(F, n_cls + n_dom, x.dtype, max_tile_k=force_tk)
        w_p, b_p, dims = prepare_fused_heads(
            [(w_cls, b_cls), (w_dom, b_dom)], plan)    # one-time setup

        y_cls, y_dom = dsn_heads_forward(x, w_p, b_p, dims, plan)
        y_cls, y_dom = jax.block_until_ready((y_cls, y_dom))

        ref_cls = jnp.dot(x, w_cls.T, precision=jax.lax.Precision.HIGHEST) + b_cls
        ref_dom = jnp.dot(x, w_dom.T, precision=jax.lax.Precision.HIGHEST) + b_dom

        for name, got, ref, c in (("class", y_cls, ref_cls, n_cls),
                                  ("domain", y_dom, ref_dom, n_dom)):
            assert got.shape == (B, c), f"config {idx} {name}: bad shape {got.shape}"
            err = float(jnp.max(jnp.abs(got - ref)))
            # bf16 weights/activations in the MXU, f32 accumulation.
            assert jnp.allclose(got, ref, rtol=2e-2, atol=2e-3), (
                f"config {idx} {name}: max abs err {err:.3e}")

    print("KERNEL_OK")
</pallas_src>

<mosaic_0001>
module attributes {stable_mosaic.version = 11 : i64} {
  func.func @_heads_kernel_single_k(%arg0: i32, %arg1: memref<8x100xf32, #tpu.memory_space<vmem>>, %arg2: memref<100x14xbf16, #tpu.memory_space<vmem>>, %arg3: memref<1x14xf32, #tpu.memory_space<vmem>>, %arg4: memref<8x14xf32, #tpu.memory_space<vmem>>) attributes {dimension_semantics = [#tpu.dimension_semantics<parallel>], iteration_bounds = array<i64: 1>, scalar_prefetch = 0 : i64, scratch_operands = 0 : i64, tpu.core_type = #tpu.core_type<tc>, window_params = [{transform_indices = @transform_0, window_bounds = array<i64: 8, 100>}, {pipeline_mode = #tpu.pipeline_mode<synchronous>, transform_indices = @transform_1, window_bounds = array<i64: 100, 14>}, {pipeline_mode = #tpu.pipeline_mode<synchronous>, transform_indices = @transform_2, window_bounds = array<i64: 1, 14>}, {transform_indices = @transform_3, window_bounds = array<i64: 8, 14>}]} {
    %c0 = arith.constant 0 : index
    %c0_0 = arith.constant 0 : index
    %0 = vector.load %arg1[%c0, %c0_0] : memref<8x100xf32, #tpu.memory_space<vmem>>, vector<8x100xf32>
    %1 = arith.truncf %0 : vector<8x100xf32> to vector<8x100xbf16>
    %c0_1 = arith.constant 0 : index
    %c0_2 = arith.constant 0 : index
    %2 = vector.load %arg2[%c0_1, %c0_2] : memref<100x14xbf16, #tpu.memory_space<vmem>>, vector<100x14xbf16>
    %cst = arith.constant dense<0.000000e+00> : vector<8x14xf32>
    %3 = tpu.matmul %1, %2, %cst {dimension_numbers = #tpu.dot_dimension_numbers<[1], [0], [0], [1], [0, 0, 1, 1], [], []>} : vector<8x100xbf16>, vector<100x14xbf16>, vector<8x14xf32> -> vector<8x14xf32>
    %c0_3 = arith.constant 0 : index
    %c0_4 = arith.constant 0 : index
    %4 = vector.load %arg3[%c0_3, %c0_4] : memref<1x14xf32, #tpu.memory_space<vmem>>, vector<1x14xf32>
    %5 = vector.broadcast %4 : vector<1x14xf32> to vector<8x14xf32>
    %6 = arith.addf %3, %5 : vector<8x14xf32>
    %c0_5 = arith.constant 0 : index
    %c0_6 = arith.constant 0 : index
    %7 = vector.load %arg4[%c0_5, %c0_6] : memref<8x14xf32, #tpu.memory_space<vmem>>, vector<8x14xf32>
    tpu.vector_store %arg4[%c0_5, %c0_6], %6 {strides = array<i32>} : memref<8x14xf32, #tpu.memory_space<vmem>>, vector<8x14xf32>,
    return
  }
  func.func @transform_0(%arg0: i32) -> (i32, i32) {
    %c0_i32 = arith.constant 0 : i32
    %c0_i32_0 = arith.constant 0 : i32
    return %arg0, %c0_i32 : i32, i32
  }
  func.func @transform_1(%arg0: i32) -> (i32, i32) {
    %c0_i32 = arith.constant 0 : i32
    %c0_i32_0 = arith.constant 0 : i32
    %c0_i32_1 = arith.constant 0 : i32
    return %c0_i32, %c0_i32_0 : i32, i32
  }
  func.func @transform_2(%arg0: i32) -> (i32, i32) {
    %c0_i32 = arith.constant 0 : i32
    %c0_i32_0 = arith.constant 0 : i32
    %c0_i32_1 = arith.constant 0 : i32
    return %c0_i32, %c0_i32_0 : i32, i32
  }
  func.func @transform_3(%arg0: i32) -> (i32, i32) {
    %c0_i32 = arith.constant 0 : i32
    %c0_i32_0 = arith.constant 0 : i32
    return %arg0, %c0_i32 : i32, i32
  }
}

</mosaic_0001>

<llo_original>
// kernel: tpu_custom_call.1
$region0: #{tpu_custom_call.1}
  #allocation0 [shape = 'u32[]', space=smem, size = 0x4, offset = 0x4, fixed_abs, tag = 'smem constant byte address 0x4 - core index']
  #allocation1 [shape = 'u32[144,128]{1,0:T(1,128)}', space=vmem, size = 0x12000, scoped, tag = 'internal scratch']
  %s0 = inlined_call_operand.vmem [shape: f32[8,100], index: 0, kind: input, shape index: {}]
  %s1 = inlined_call_operand.vmem [shape: bf16[100,14], index: 1, kind: input, shape index: {}]
  %s2 = inlined_call_operand.vmem [shape: f32[1,14], index: 2, kind: input, shape index: {}]
  %s3 = inlined_call_operand.hbm [shape: f32[8,14], index: 3, kind: output, shape index: {}]
  %s4 = sld [smem:[#allocation0]]
  $region22: #{tpu_custom_call.1} parent=0
    _
  %s6 = ssub.s32 1, %s4
  %s7 = scalar_select 0, %s6, %s4
  $region1: #{tpu_custom_call.1} parent=0
    #allocation2 [shape = 'u8[4096]{0}', space=vmem, size = 0x1000, scoped, tag = 'output window, operand 0, single buffered']
    #allocation3 [shape = 's32[1]{0}', space=sflag, size = 0x4, scoped, tag = 'scoped memory for tpu_custom_call.1']
    %8 = vsyncpa [#allocation3], 0
    // Predicated region
    $region2: #{tpu_custom_call.1} parent=1 // pred_check
      _
    $region3: #{tpu_custom_call.1} parent=1 // pred_check_branch
      %10 = sbr.rel (0) target = $region5
    $region4: #{tpu_custom_call.1} parent=1 // pred_region
      _
    $region5: #{tpu_custom_call.1} parent=1 // pred_fallthru
      _
    // Predicated region
    $region6: #{tpu_custom_call.1} parent=1 // pred_check
      _
    $region7: #{tpu_custom_call.1} parent=1 // pred_check_branch
      %12 = sbr.rel (0) target = $region9
    $region8: #{tpu_custom_call.1} parent=1 // pred_region
      _
    $region9: #{tpu_custom_call.1} parent=1 // pred_fallthru
      _
    // Predicated region
    $region10: #{tpu_custom_call.1} parent=1 // pred_check
      _
    $region11: #{tpu_custom_call.1} parent=1 // pred_check_branch
      %14 = sbr.rel (0) target = $region13
    $region12: #{tpu_custom_call.1} parent=1 // pred_region
      _
    $region13: #{tpu_custom_call.1} parent=1 // pred_fallthru
      _
    %v16 = vld [vmem:[%s0] sm:$0xff]
    %v17 = vpack.c.bf16 %v16, %v16
    %v18 = vld [vmem:[%s1] sm:$0xf]
    %v19 = vld [vmem:[%s1 + $0x4] sm:$0xf]
    %v20 = vld [vmem:[%s1 + $0x8] sm:$0xf]
    %v21 = vld [vmem:[%s1 + $0xc] sm:$0xf]
    %v22 = vld [vmem:[%s1 + $0x10] sm:$0xf]
    %v23 = vld [vmem:[%s1 + $0x14] sm:$0xf]
    %v24 = vld [vmem:[%s1 + $0x18] sm:$0xf]
    %v25 = vld [vmem:[%s1 + $0x1c] sm:$0xf]
    %v26 = vld [vmem:[%s1 + $0x20] sm:$0xf]
    %v27 = vld [vmem:[%s1 + $0x24] sm:$0xf]
    %v28 = vld [vmem:[%s1 + $0x28] sm:$0xf]
    %v29 = vld [vmem:[%s1 + $0x2c] sm:$0xf]
    %v30 = vld [vmem:[%s1 + $0x30] sm:$0x3]
    %v31 = vld [vmem:[%s2] sm:$0x1]
    %v33 = vlaneseq
    %v34 = vshrl.u32 %v33, 7
    %v35 = vsub.s32 0, %v34
    %v36 = vrot.slane %v31, %v35
    %v51 = vunpack.c.l.b16 %v18
    %v52 = vunpack.c.l.b16 %v19
    %v53 = vunpack.c.l.b16 %v20
    %v54 = vunpack.c.l.b16 %v21
    %v55 = vunpack.c.l.b16 %v22
    %v56 = vunpack.c.l.b16 %v23
    %v57 = vunpack.c.l.b16 %v24
    %v58 = vunpack.c.l.b16 %v25
    %v59 = vunpack.c.l.b16 %v26
    %v60 = vunpack.c.l.b16 %v27
    %v61 = vunpack.c.l.b16 %v28
    %v62 = vunpack.c.l.b16 %v29
    %v63 = vunpack.c.l.b16 %v30
    %v64 = vpack.c.b16 %v52, %v51
    %v65 = vpack.c.b16 %v54, %v53
    %v66 = vpack.c.b16 %v56, %v55
    %v67 = vpack.c.b16 %v58, %v57
    %v68 = vpack.c.b16 %v60, %v59
    %v69 = vpack.c.b16 %v62, %v61
    %v70 = vpack.c.b16 %v63, %v63
    %vm77 = vcmask 818176
    %v79 = vsel %vm77, %v17, 0
    %vm81 = vcmask 1041408
    %v83 = vsel %vm81, %v70, 0
    %85 = vmatprep.subr.bf16.mxu0 0
    %86 = vmatpush1.bf16.msra.mxu0 0
    %87 = vmatprep.subr.bf16.mxu0 0
    %88 = vmatpush1.bf16.msra.mxu0 %v83
    %89 = vmatprep.subr.bf16.mxu0 0
    %90 = vmatpush1.bf16.msra.mxu0 %v69
    %91 = vmatprep.subr.bf16.mxu0 0
    %92 = vmatpush1.bf16.msra.mxu0 %v68
    %93 = vmatprep.subr.bf16.mxu0 0
    %94 = vmatpush1.bf16.msra.mxu0 %v67
    %95 = vmatprep.subr.bf16.mxu0 0
    %96 = vmatpush1.bf16.msra.mxu0 %v66
    %97 = vmatprep.subr.bf16.mxu0 0
    %98 = vmatpush1.bf16.msra.mxu0 %v65
    %99 = vmatprep.subr.bf16.mxu0 0
    %100 = vmatpush1.bf16.msra.mxu0 %v64
    %101 = vmatprep.subr.bf16.mxu0 0
    %102 = vmatpush2.bf16.msra.mxu0 0
    %103 = vmatprep.subr.bf16.mxu0 0
    %104 = vmatpush2.bf16.msra.mxu0 0
    %105 = vmatprep.subr.bf16.mxu0 0
    %106 = vmatpush2.bf16.msra.mxu0 0
    %107 = vmatprep.subr.bf16.mxu0 0
    %108 = vmatpush2.bf16.msra.mxu0 0
    %109 = vmatprep.subr.bf16.mxu0 0
    %110 = vmatpush2.bf16.msra.mxu0 0
    %111 = vmatprep.subr.bf16.mxu0 0
    %112 = vmatpush2.bf16.msra.mxu0 0
    %113 = vmatprep.subr.bf16.mxu0 0
    %114 = vmatpush2.bf16.msra.mxu0 0
    %115 = vmatprep.subr.bf16.mxu0 0
    %116 = vmatpush2.bf16.msra.mxu0 0
    %117 = vmatprep.mubr.bf16.mxu0 0
    %118 = vmatmul.mubr.bf16.gmra.mxu0 %v79
    %v119 = vpop.f32.mrf.mxu0
    %v120 = vadd.f32 %v36, %v119
    %v121 = vpop.f32.mrf.mxu0
    %v122 = vpop.f32.mrf.mxu0
    %v123 = vpop.f32.mrf.mxu0
    %124 = vdwg.mxu0
    %vm125 = vcmask 113664
    %126 = vst.msk [vmem:[#allocation2] sm:$0xff] %vm125, %v120
    // Predicated region
    $region14: #{tpu_custom_call.1} parent=1 // pred_check
      _
    $region15: #{tpu_custom_call.1} parent=1 // pred_check_branch
      %128 = sbr.rel (0) target = $region17
    $region16: #{tpu_custom_call.1} parent=1 // pred_region
      %s130 = ssub.s32 128, 128
      %131 = vsyncadd [#allocation3], %s130
      %s133 = sshll.u32 [#allocation2], 4
      %s134 = int_to_ptr.vmem [resolvable:$true] %s133
      %136 = dma.vmem_to_hbm [thread:$0]  %s134, 128, %s3, [#allocation3]
    $region17: #{tpu_custom_call.1} parent=1 // pred_fallthru
      _
    // Predicated region
    $region18: #{tpu_custom_call.1} parent=1 // pred_check
      _
    $region19: #{tpu_custom_call.1} parent=1 // pred_check_branch
      %138 = sbr.rel (0) target = $region21
    $region20: #{tpu_custom_call.1} parent=1 // pred_region
      %139 = dma.done [#allocation3], 128
    $region21: #{tpu_custom_call.1} parent=1 // pred_fallthru
      _
    %140 = vsyncpa [#allocation3], 1

</llo_original>
